<compile_context>
chip_gen: v7x
topology: tpu7x:2x2x1
jax: 0.10.0
libtpu: 0.0.40
codegen_flags: <defaults>
</compile_context>

<pallas_src>
import jax
import jax.numpy as jnp
from jax.experimental import pallas as pl
from jax.experimental.pallas import tpu as pltpu


def _agru_kernel(f_ref, g_ref, ww_ref, uw_ref, bpw_ref, bu_ref, out_ref, p_ref):
    S, B, H = f_ref.shape

    # ---- Prologue: fact projections have no dependence on C, so do them once.
    # (S*B, H) bf16 @ (H, 2H) bf16 -> f32, staged in a VMEM scratch (not vregs)
    # so the unrolled loop below does not keep 16+ vregs live across 8 steps.
    facts2d = f_ref[...].reshape(S * B, H)          # free view: B is a multiple of 8 sublanes
    p_ref[...] = (jnp.dot(facts2d, ww_ref[...], preferred_element_type=jnp.float32)
                  + bpw_ref[...])                   # fused bias [b_Wr + b_Ur | b_W]

    C = jnp.zeros((B, H), jnp.float32)
    # Statically unrolled recurrence (S is small & static). The only MXU op on
    # the serial critical path is the single fused bf16 C @ [UrT | UT] per step.
    for s in range(S):
        p = p_ref[s * B:(s + 1) * B, :]                                   # (B, 2H) from VMEM
        uc = jnp.dot(C.astype(jnp.bfloat16), uw_ref[...],                 # RHS re-read from VMEM
                     preferred_element_type=jnp.float32)                  # (B, 2H)
        # sigmoid(x) = 1 / (1 + exp(-x)); approximate reciprocal on the EUP slot.
        r = pl.reciprocal(1.0 + jnp.exp(-(p[:, :H] + uc[:, :H])), approx=True)
        h_tilda = jnp.tanh(p[:, H:] + r * (uc[:, H:] + bu_ref[...]))
        g = g_ref[:, s:s + 1]                                             # (B, 1) -> lane broadcast
        C = g * h_tilda + (1.0 - g) * C

    out_ref[...] = C.astype(out_ref.dtype)          # single final store


def fuse_params(WrT, UrT, WT, UT, biases):
    """One-time parameter fusion (do this at init / param-load time, not per call)."""
    WW = jnp.concatenate([WrT, WT], axis=1).astype(jnp.bfloat16)                # (H, 2H)
    UW = jnp.concatenate([UrT, UT], axis=1).astype(jnp.bfloat16)                # (H, 2H)
    bias_pw = jnp.concatenate([biases[0] + biases[1], biases[2]])[None, :]      # (1, 2H) f32
    b_u = biases[3][None, :]                                                    # (1, H)  f32
    return WW, UW, bias_pw, b_u


def attention_gru(facts, G, WW, UW, bias_pw, b_u):
    """facts: (B, S, H) f32, G: (B, S) f32, fused params from fuse_params -> C: (B, H)."""
    B, S, H = facts.shape

    # Sequence-major + bf16 facts (fused into one XLA op under jit) so each
    # step's (B, H) tile is a contiguous slab and the MXU sees bf16 operands.
    facts_t = jnp.transpose(facts, (1, 0, 2)).astype(jnp.bfloat16)              # (S, B, H)

    flops = 4 * S * B * H * (2 * H) + 12 * S * B * H          # prologue + per-step dots + blend
    transcendentals = 3 * S * B * H                            # exp, reciprocal, tanh per element
    bytes_accessed = (S * B * H * 2 + B * S * 4                # facts (bf16) + gates
                      + 2 * (H * 2 * H * 2)                    # WW + UW (bf16)
                      + 2 * H * 4 + H * 4                      # biases
                      + B * H * 4)                             # output

    return pl.pallas_call(
        _agru_kernel,
        out_shape=jax.ShapeDtypeStruct((B, H), jnp.float32),
        grid_spec=pltpu.PrefetchScalarGridSpec(
            num_scalar_prefetch=0,
            grid=(1,),                                         # whole recurrence in one invocation
            in_specs=[
                pl.BlockSpec((S, B, H), lambda i: (0, 0, 0)),  # facts, sequence-major, bf16
                pl.BlockSpec((B, S), lambda i: (0, 0)),        # gates, small (B, S) slab
                pl.BlockSpec((H, 2 * H), lambda i: (0, 0)),    # [WrT | WT]  bf16
                pl.BlockSpec((H, 2 * H), lambda i: (0, 0)),    # [UrT | UT]  bf16
                pl.BlockSpec((1, 2 * H), lambda i: (0, 0)),    # fused fact bias
                pl.BlockSpec((1, H), lambda i: (0, 0)),        # b_U
            ],
            out_specs=pl.BlockSpec((B, H), lambda i: (0, 0)),
            scratch_shapes=[pltpu.VMEM((S * B, 2 * H), jnp.float32)],   # staged fact projections
        ),
        compiler_params=pltpu.CompilerParams(
            dimension_semantics=("arbitrary",),
            vmem_limit_bytes=32 * 1024 * 1024),
        cost_estimate=pl.CostEstimate(
            flops=flops, transcendentals=transcendentals,
            bytes_accessed=bytes_accessed),
    )(facts_t, G, WW, UW, bias_pw, b_u)


def reference_attention_gru(facts, G, WrT, UrT, WT, UT, biases):
    B, S, H = facts.shape
    C = jnp.zeros((B, H), jnp.float32)
    for sid in range(S):
        fact = facts[:, sid, :]
        g = G[:, sid][:, None]
        r = jax.nn.sigmoid(fact @ WrT + biases[0] + C @ UrT + biases[1])
        h_tilda = jnp.tanh(fact @ WT + biases[2] + r * (C @ UT + biases[3]))
        C = g * h_tilda + (1.0 - g) * C
    return C


def init_params(key, hidden):
    # Xavier-normal weights (as in the PyTorch __init__), uniform biases
    # (PyTorch nn.Linear default), all deterministic from the key.
    ks = jax.random.split(key, 8)
    std = (2.0 / (hidden + hidden)) ** 0.5
    bound = 1.0 / (hidden ** 0.5)
    wrT = std * jax.random.normal(ks[0], (hidden, hidden), jnp.float32)
    urT = std * jax.random.normal(ks[1], (hidden, hidden), jnp.float32)
    wT = std * jax.random.normal(ks[2], (hidden, hidden), jnp.float32)
    uT = std * jax.random.normal(ks[3], (hidden, hidden), jnp.float32)
    biases = jnp.stack([
        jax.random.uniform(ks[4 + i], (hidden,), jnp.float32, -bound, bound)
        for i in range(4)
    ])  # (4, H): [b_Wr, b_Ur, b_W, b_U]
    return wrT, urT, wT, uT, biases


if __name__ == "__main__":
    B, S, H = 8, 8, 128   # batch, sentences, hidden (= input embedding size)

    key = jax.random.PRNGKey(0)
    k_facts, k_g, k_params = jax.random.split(key, 3)

    facts = jax.random.normal(k_facts, (B, S, H), jnp.float32)
    # G are attention gates, typically softmax outputs in [0, 1]
    G = jax.nn.softmax(jax.random.normal(k_g, (B, S), jnp.float32), axis=-1)

    WrT, UrT, WT, UT, biases = init_params(k_params, H)

    # Parameter fusion happens ONCE (init time), not per call.
    WW, UW, bias_pw, b_u = fuse_params(WrT, UrT, WT, UT, biases)

    agru = jax.jit(attention_gru)   # fuses the facts transpose+cast prep into the call
    out = jax.block_until_ready(agru(facts, G, WW, UW, bias_pw, b_u))

    ref = reference_attention_gru(facts, G, WrT, UrT, WT, UT, biases)
    assert out.shape == (B, H)
    # bf16 MXU operands + approx reciprocal -> relaxed tolerance vs f32 reference.
    err = float(jnp.max(jnp.abs(out - ref)))
    assert jnp.allclose(out, ref, atol=3e-2, rtol=3e-2), f"mismatch vs JAX reference (max abs err {err})"

    print("KERNEL_OK")
</pallas_src>

<mosaic_0001>
module attributes {stable_mosaic.version = 11 : i64} {
  func.func @_agru_kernel(%arg0: i32, %arg1: memref<8x8x128xbf16, #tpu.memory_space<vmem>>, %arg2: memref<8x8xf32, #tpu.memory_space<vmem>>, %arg3: memref<128x256xbf16, #tpu.memory_space<vmem>>, %arg4: memref<128x256xbf16, #tpu.memory_space<vmem>>, %arg5: memref<1x256xf32, #tpu.memory_space<vmem>>, %arg6: memref<1x128xf32, #tpu.memory_space<vmem>>, %arg7: memref<8x128xf32, #tpu.memory_space<vmem>>, %arg8: memref<64x256xf32, #tpu.memory_space<vmem>>) attributes {dimension_semantics = [#tpu.dimension_semantics<arbitrary>], iteration_bounds = array<i64: 1>, scalar_prefetch = 0 : i64, scratch_operands = 1 : i64, tpu.core_type = #tpu.core_type<tc>, window_params = [{pipeline_mode = #tpu.pipeline_mode<synchronous>, transform_indices = @transform_0, window_bounds = array<i64: 8, 8, 128>}, {pipeline_mode = #tpu.pipeline_mode<synchronous>, transform_indices = @transform_1, window_bounds = array<i64: 8, 8>}, {pipeline_mode = #tpu.pipeline_mode<synchronous>, transform_indices = @transform_2, window_bounds = array<i64: 128, 256>}, {pipeline_mode = #tpu.pipeline_mode<synchronous>, transform_indices = @transform_3, window_bounds = array<i64: 128, 256>}, {pipeline_mode = #tpu.pipeline_mode<synchronous>, transform_indices = @transform_4, window_bounds = array<i64: 1, 256>}, {pipeline_mode = #tpu.pipeline_mode<synchronous>, transform_indices = @transform_5, window_bounds = array<i64: 1, 128>}, {pipeline_mode = #tpu.pipeline_mode<synchronous>, transform_indices = @transform_6, window_bounds = array<i64: 8, 128>}]} {
    %c0 = arith.constant 0 : index
    %c0_0 = arith.constant 0 : index
    %c0_1 = arith.constant 0 : index
    %0 = vector.load %arg1[%c0, %c0_0, %c0_1] : memref<8x8x128xbf16, #tpu.memory_space<vmem>>, vector<8x8x128xbf16>
    %1 = vector.shape_cast %0 : vector<8x8x128xbf16> to vector<64x128xbf16>
    %c0_2 = arith.constant 0 : index
    %c0_3 = arith.constant 0 : index
    %2 = vector.load %arg3[%c0_2, %c0_3] : memref<128x256xbf16, #tpu.memory_space<vmem>>, vector<128x256xbf16>
    %cst = arith.constant dense<0.000000e+00> : vector<64x256xf32>
    %3 = tpu.matmul %1, %2, %cst {dimension_numbers = #tpu.dot_dimension_numbers<[1], [0], [0], [1], [0, 0, 1, 1], [], []>} : vector<64x128xbf16>, vector<128x256xbf16>, vector<64x256xf32> -> vector<64x256xf32>
    %c0_4 = arith.constant 0 : index
    %c0_5 = arith.constant 0 : index
    %4 = vector.load %arg5[%c0_4, %c0_5] : memref<1x256xf32, #tpu.memory_space<vmem>>, vector<1x256xf32>
    %5 = vector.broadcast %4 : vector<1x256xf32> to vector<64x256xf32>
    %6 = arith.addf %3, %5 : vector<64x256xf32>
    %c0_6 = arith.constant 0 : index
    %c0_7 = arith.constant 0 : index
    %7 = vector.load %arg8[%c0_6, %c0_7] : memref<64x256xf32, #tpu.memory_space<vmem>>, vector<64x256xf32>
    tpu.vector_store %arg8[%c0_6, %c0_7], %6 {strides = array<i32>} : memref<64x256xf32, #tpu.memory_space<vmem>>, vector<64x256xf32>,
    %cst_8 = arith.constant 0.000000e+00 : f32
    %8 = vector.broadcast %cst_8 : f32 to vector<8x128xf32>
    %c0_9 = arith.constant 0 : index
    %c0_10 = arith.constant 0 : index
    %9 = vector.load %arg8[%c0_9, %c0_10] : memref<64x256xf32, #tpu.memory_space<vmem>>, vector<8x256xf32>
    %10 = arith.truncf %8 : vector<8x128xf32> to vector<8x128xbf16>
    %c0_11 = arith.constant 0 : index
    %c0_12 = arith.constant 0 : index
    %11 = vector.load %arg4[%c0_11, %c0_12] : memref<128x256xbf16, #tpu.memory_space<vmem>>, vector<128x256xbf16>
    %cst_13 = arith.constant dense<0.000000e+00> : vector<8x256xf32>
    %12 = tpu.matmul %10, %11, %cst_13 {dimension_numbers = #tpu.dot_dimension_numbers<[1], [0], [0], [1], [0, 0, 1, 1], [], []>} : vector<8x128xbf16>, vector<128x256xbf16>, vector<8x256xf32> -> vector<8x256xf32>
    %13 = vector.extract_strided_slice %9 {offsets = [0, 0], sizes = [8, 128], strides = [1, 1]} : vector<8x256xf32> to vector<8x128xf32>
    %14 = vector.extract_strided_slice %12 {offsets = [0, 0], sizes = [8, 128], strides = [1, 1]} : vector<8x256xf32> to vector<8x128xf32>
    %15 = arith.addf %13, %14 : vector<8x128xf32>
    %cst_14 = arith.constant 0.000000e+00 : f32
    %16 = vector.broadcast %cst_14 : f32 to vector<8x128xf32>
    %17 = arith.subf %16, %15 : vector<8x128xf32>
    %18 = math.exp %17 : vector<8x128xf32>
    %cst_15 = arith.constant 1.000000e+00 : f32
    %19 = vector.broadcast %cst_15 : f32 to vector<8x128xf32>
    %20 = arith.addf %19, %18 : vector<8x128xf32>
    %21 = tpu.reciprocal %20 {approx = true} : vector<8x128xf32> -> vector<8x128xf32>
    %22 = vector.extract_strided_slice %9 {offsets = [0, 128], sizes = [8, 128], strides = [1, 1]} : vector<8x256xf32> to vector<8x128xf32>
    %23 = vector.extract_strided_slice %12 {offsets = [0, 128], sizes = [8, 128], strides = [1, 1]} : vector<8x256xf32> to vector<8x128xf32>
    %c0_16 = arith.constant 0 : index
    %c0_17 = arith.constant 0 : index
    %24 = vector.load %arg6[%c0_16, %c0_17] : memref<1x128xf32, #tpu.memory_space<vmem>>, vector<1x128xf32>
    %25 = vector.broadcast %24 : vector<1x128xf32> to vector<8x128xf32>
    %26 = arith.addf %23, %25 : vector<8x128xf32>
    %27 = arith.mulf %21, %26 : vector<8x128xf32>
    %28 = arith.addf %22, %27 : vector<8x128xf32>
    %29 = math.tanh %28 : vector<8x128xf32>
    %c0_18 = arith.constant 0 : index
    %c0_19 = arith.constant 0 : index
    %30 = vector.load %arg2[%c0_18, %c0_19] : memref<8x8xf32, #tpu.memory_space<vmem>>, vector<8x1xf32>
    %31 = vector.broadcast %30 : vector<8x1xf32> to vector<8x128xf32>
    %32 = arith.mulf %31, %29 : vector<8x128xf32>
    %cst_20 = arith.constant 1.000000e+00 : f32
    %33 = vector.broadcast %cst_20 : f32 to vector<8x1xf32>
    %34 = arith.subf %33, %30 : vector<8x1xf32>
    %35 = vector.broadcast %34 : vector<8x1xf32> to vector<8x128xf32>
    %36 = arith.mulf %35, %8 : vector<8x128xf32>
    %37 = arith.addf %32, %36 : vector<8x128xf32>
    %c8 = arith.constant 8 : index
    %c0_21 = arith.constant 0 : index
    %38 = vector.load %arg8[%c8, %c0_21] : memref<64x256xf32, #tpu.memory_space<vmem>>, vector<8x256xf32>
    %39 = arith.truncf %37 : vector<8x128xf32> to vector<8x128xbf16>
    %c0_22 = arith.constant 0 : index
    %c0_23 = arith.constant 0 : index
    %40 = vector.load %arg4[%c0_22, %c0_23] : memref<128x256xbf16, #tpu.memory_space<vmem>>, vector<128x256xbf16>
    %cst_24 = arith.constant dense<0.000000e+00> : vector<8x256xf32>
    %41 = tpu.matmul %39, %40, %cst_24 {dimension_numbers = #tpu.dot_dimension_numbers<[1], [0], [0], [1], [0, 0, 1, 1], [], []>} : vector<8x128xbf16>, vector<128x256xbf16>, vector<8x256xf32> -> vector<8x256xf32>
    %42 = vector.extract_strided_slice %38 {offsets = [0, 0], sizes = [8, 128], strides = [1, 1]} : vector<8x256xf32> to vector<8x128xf32>
    %43 = vector.extract_strided_slice %41 {offsets = [0, 0], sizes = [8, 128], strides = [1, 1]} : vector<8x256xf32> to vector<8x128xf32>
    %44 = arith.addf %42, %43 : vector<8x128xf32>
    %cst_25 = arith.constant 0.000000e+00 : f32
    %45 = vector.broadcast %cst_25 : f32 to vector<8x128xf32>
    %46 = arith.subf %45, %44 : vector<8x128xf32>
    %47 = math.exp %46 : vector<8x128xf32>
    %cst_26 = arith.constant 1.000000e+00 : f32
    %48 = vector.broadcast %cst_26 : f32 to vector<8x128xf32>
    %49 = arith.addf %48, %47 : vector<8x128xf32>
    %50 = tpu.reciprocal %49 {approx = true} : vector<8x128xf32> -> vector<8x128xf32>
    %51 = vector.extract_strided_slice %38 {offsets = [0, 128], sizes = [8, 128], strides = [1, 1]} : vector<8x256xf32> to vector<8x128xf32>
    %52 = vector.extract_strided_slice %41 {offsets = [0, 128], sizes = [8, 128], strides = [1, 1]} : vector<8x256xf32> to vector<8x128xf32>
    %c0_27 = arith.constant 0 : index
    %c0_28 = arith.constant 0 : index
    %53 = vector.load %arg6[%c0_27, %c0_28] : memref<1x128xf32, #tpu.memory_space<vmem>>, vector<1x128xf32>
    %54 = vector.broadcast %53 : vector<1x128xf32> to vector<8x128xf32>
    %55 = arith.addf %52, %54 : vector<8x128xf32>
    %56 = arith.mulf %50, %55 : vector<8x128xf32>
    %57 = arith.addf %51, %56 : vector<8x128xf32>
    %58 = math.tanh %57 : vector<8x128xf32>
    %c0_29 = arith.constant 0 : index
    %c1 = arith.constant 1 : index
    %59 = vector.load %arg2[%c0_29, %c1] : memref<8x8xf32, #tpu.memory_space<vmem>>, vector<8x1xf32>
    %60 = vector.broadcast %59 : vector<8x1xf32> to vector<8x128xf32>
    %61 = arith.mulf %60, %58 : vector<8x128xf32>
    %cst_30 = arith.constant 1.000000e+00 : f32
    %62 = vector.broadcast %cst_30 : f32 to vector<8x1xf32>
    %63 = arith.subf %62, %59 : vector<8x1xf32>
    %64 = vector.broadcast %63 : vector<8x1xf32> to vector<8x128xf32>
    %65 = arith.mulf %64, %37 : vector<8x128xf32>
    %66 = arith.addf %61, %65 : vector<8x128xf32>
    %c16 = arith.constant 16 : index
    %c0_31 = arith.constant 0 : index
    %67 = vector.load %arg8[%c16, %c0_31] : memref<64x256xf32, #tpu.memory_space<vmem>>, vector<8x256xf32>
    %68 = arith.truncf %66 : vector<8x128xf32> to vector<8x128xbf16>
    %c0_32 = arith.constant 0 : index
    %c0_33 = arith.constant 0 : index
    %69 = vector.load %arg4[%c0_32, %c0_33] : memref<128x256xbf16, #tpu.memory_space<vmem>>, vector<128x256xbf16>
    %cst_34 = arith.constant dense<0.000000e+00> : vector<8x256xf32>
    %70 = tpu.matmul %68, %69, %cst_34 {dimension_numbers = #tpu.dot_dimension_numbers<[1], [0], [0], [1], [0, 0, 1, 1], [], []>} : vector<8x128xbf16>, vector<128x256xbf16>, vector<8x256xf32> -> vector<8x256xf32>
    %71 = vector.extract_strided_slice %67 {offsets = [0, 0], sizes = [8, 128], strides = [1, 1]} : vector<8x256xf32> to vector<8x128xf32>
    %72 = vector.extract_strided_slice %70 {offsets = [0, 0], sizes = [8, 128], strides = [1, 1]} : vector<8x256xf32> to vector<8x128xf32>
    %73 = arith.addf %71, %72 : vector<8x128xf32>
    %cst_35 = arith.constant 0.000000e+00 : f32
    %74 = vector.broadcast %cst_35 : f32 to vector<8x128xf32>
    %75 = arith.subf %74, %73 : vector<8x128xf32>
    %76 = math.exp %75 : vector<8x128xf32>
    %cst_36 = arith.constant 1.000000e+00 : f32
    %77 = vector.broadcast %cst_36 : f32 to vector<8x128xf32>
    %78 = arith.addf %77, %76 : vector<8x128xf32>
    %79 = tpu.reciprocal %78 {approx = true} : vector<8x128xf32> -> vector<8x128xf32>
    %80 = vector.extract_strided_slice %67 {offsets = [0, 128], sizes = [8, 128], strides = [1, 1]} : vector<8x256xf32> to vector<8x128xf32>
    %81 = vector.extract_strided_slice %70 {offsets = [0, 128], sizes = [8, 128], strides = [1, 1]} : vector<8x256xf32> to vector<8x128xf32>
    %c0_37 = arith.constant 0 : index
    %c0_38 = arith.constant 0 : index
    %82 = vector.load %arg6[%c0_37, %c0_38] : memref<1x128xf32, #tpu.memory_space<vmem>>, vector<1x128xf32>
    %83 = vector.broadcast %82 : vector<1x128xf32> to vector<8x128xf32>
    %84 = arith.addf %81, %83 : vector<8x128xf32>
    %85 = arith.mulf %79, %84 : vector<8x128xf32>
    %86 = arith.addf %80, %85 : vector<8x128xf32>
    %87 = math.tanh %86 : vector<8x128xf32>
    %c0_39 = arith.constant 0 : index
    %c2 = arith.constant 2 : index
    %88 = vector.load %arg2[%c0_39, %c2] : memref<8x8xf32, #tpu.memory_space<vmem>>, vector<8x1xf32>
    %89 = vector.broadcast %88 : vector<8x1xf32> to vector<8x128xf32>
    %90 = arith.mulf %89, %87 : vector<8x128xf32>
    %cst_40 = arith.constant 1.000000e+00 : f32
    %91 = vector.broadcast %cst_40 : f32 to vector<8x1xf32>
    %92 = arith.subf %91, %88 : vector<8x1xf32>
    %93 = vector.broadcast %92 : vector<8x1xf32> to vector<8x128xf32>
    %94 = arith.mulf %93, %66 : vector<8x128xf32>
    %95 = arith.addf %90, %94 : vector<8x128xf32>
    %c24 = arith.constant 24 : index
    %c0_41 = arith.constant 0 : index
    %96 = vector.load %arg8[%c24, %c0_41] : memref<64x256xf32, #tpu.memory_space<vmem>>, vector<8x256xf32>
    %97 = arith.truncf %95 : vector<8x128xf32> to vector<8x128xbf16>
    %c0_42 = arith.constant 0 : index
    %c0_43 = arith.constant 0 : index
    %98 = vector.load %arg4[%c0_42, %c0_43] : memref<128x256xbf16, #tpu.memory_space<vmem>>, vector<128x256xbf16>
    %cst_44 = arith.constant dense<0.000000e+00> : vector<8x256xf32>
    %99 = tpu.matmul %97, %98, %cst_44 {dimension_numbers = #tpu.dot_dimension_numbers<[1], [0], [0], [1], [0, 0, 1, 1], [], []>} : vector<8x128xbf16>, vector<128x256xbf16>, vector<8x256xf32> -> vector<8x256xf32>
    %100 = vector.extract_strided_slice %96 {offsets = [0, 0], sizes = [8, 128], strides = [1, 1]} : vector<8x256xf32> to vector<8x128xf32>
    %101 = vector.extract_strided_slice %99 {offsets = [0, 0], sizes = [8, 128], strides = [1, 1]} : vector<8x256xf32> to vector<8x128xf32>
    %102 = arith.addf %100, %101 : vector<8x128xf32>
    %cst_45 = arith.constant 0.000000e+00 : f32
    %103 = vector.broadcast %cst_45 : f32 to vector<8x128xf32>
    %104 = arith.subf %103, %102 : vector<8x128xf32>
    %105 = math.exp %104 : vector<8x128xf32>
    %cst_46 = arith.constant 1.000000e+00 : f32
    %106 = vector.broadcast %cst_46 : f32 to vector<8x128xf32>
    %107 = arith.addf %106, %105 : vector<8x128xf32>
    %108 = tpu.reciprocal %107 {approx = true} : vector<8x128xf32> -> vector<8x128xf32>
    %109 = vector.extract_strided_slice %96 {offsets = [0, 128], sizes = [8, 128], strides = [1, 1]} : vector<8x256xf32> to vector<8x128xf32>
    %110 = vector.extract_strided_slice %99 {offsets = [0, 128], sizes = [8, 128], strides = [1, 1]} : vector<8x256xf32> to vector<8x128xf32>
    %c0_47 = arith.constant 0 : index
    %c0_48 = arith.constant 0 : index
    %111 = vector.load %arg6[%c0_47, %c0_48] : memref<1x128xf32, #tpu.memory_space<vmem>>, vector<1x128xf32>
    %112 = vector.broadcast %111 : vector<1x128xf32> to vector<8x128xf32>
    %113 = arith.addf %110, %112 : vector<8x128xf32>
    %114 = arith.mulf %108, %113 : vector<8x128xf32>
    %115 = arith.addf %109, %114 : vector<8x128xf32>
    %116 = math.tanh %115 : vector<8x128xf32>
    %c0_49 = arith.constant 0 : index
    %c3 = arith.constant 3 : index
    %117 = vector.load %arg2[%c0_49, %c3] : memref<8x8xf32, #tpu.memory_space<vmem>>, vector<8x1xf32>
    %118 = vector.broadcast %117 : vector<8x1xf32> to vector<8x128xf32>
    %119 = arith.mulf %118, %116 : vector<8x128xf32>
    %cst_50 = arith.constant 1.000000e+00 : f32
    %120 = vector.broadcast %cst_50 : f32 to vector<8x1xf32>
    %121 = arith.subf %120, %117 : vector<8x1xf32>
    %122 = vector.broadcast %121 : vector<8x1xf32> to vector<8x128xf32>
    %123 = arith.mulf %122, %95 : vector<8x128xf32>
    %124 = arith.addf %119, %123 : vector<8x128xf32>
    %c32 = arith.constant 32 : index
    %c0_51 = arith.constant 0 : index
    %125 = vector.load %arg8[%c32, %c0_51] : memref<64x256xf32, #tpu.memory_space<vmem>>, vector<8x256xf32>
    %126 = arith.truncf %124 : vector<8x128xf32> to vector<8x128xbf16>
    %c0_52 = arith.constant 0 : index
    %c0_53 = arith.constant 0 : index
    %127 = vector.load %arg4[%c0_52, %c0_53] : memref<128x256xbf16, #tpu.memory_space<vmem>>, vector<128x256xbf16>
    %cst_54 = arith.constant dense<0.000000e+00> : vector<8x256xf32>
    %128 = tpu.matmul %126, %127, %cst_54 {dimension_numbers = #tpu.dot_dimension_numbers<[1], [0], [0], [1], [0, 0, 1, 1], [], []>} : vector<8x128xbf16>, vector<128x256xbf16>, vector<8x256xf32> -> vector<8x256xf32>
    %129 = vector.extract_strided_slice %125 {offsets = [0, 0], sizes = [8, 128], strides = [1, 1]} : vector<8x256xf32> to vector<8x128xf32>
    %130 = vector.extract_strided_slice %128 {offsets = [0, 0], sizes = [8, 128], strides = [1, 1]} : vector<8x256xf32> to vector<8x128xf32>
    %131 = arith.addf %129, %130 : vector<8x128xf32>
    %cst_55 = arith.constant 0.000000e+00 : f32
    %132 = vector.broadcast %cst_55 : f32 to vector<8x128xf32>
    %133 = arith.subf %132, %131 : vector<8x128xf32>
    %134 = math.exp %133 : vector<8x128xf32>
    %cst_56 = arith.constant 1.000000e+00 : f32
    %135 = vector.broadcast %cst_56 : f32 to vector<8x128xf32>
    %136 = arith.addf %135, %134 : vector<8x128xf32>
    %137 = tpu.reciprocal %136 {approx = true} : vector<8x128xf32> -> vector<8x128xf32>
    %138 = vector.extract_strided_slice %125 {offsets = [0, 128], sizes = [8, 128], strides = [1, 1]} : vector<8x256xf32> to vector<8x128xf32>
    %139 = vector.extract_strided_slice %128 {offsets = [0, 128], sizes = [8, 128], strides = [1, 1]} : vector<8x256xf32> to vector<8x128xf32>
    %c0_57 = arith.constant 0 : index
    %c0_58 = arith.constant 0 : index
    %140 = vector.load %arg6[%c0_57, %c0_58] : memref<1x128xf32, #tpu.memory_space<vmem>>, vector<1x128xf32>
    %141 = vector.broadcast %140 : vector<1x128xf32> to vector<8x128xf32>
    %142 = arith.addf %139, %141 : vector<8x128xf32>
    %143 = arith.mulf %137, %142 : vector<8x128xf32>
    %144 = arith.addf %138, %143 : vector<8x128xf32>
    %145 = math.tanh %144 : vector<8x128xf32>
    %c0_59 = arith.constant 0 : index
    %c4 = arith.constant 4 : index
    %146 = vector.load %arg2[%c0_59, %c4] : memref<8x8xf32, #tpu.memory_space<vmem>>, vector<8x1xf32>
    %147 = vector.broadcast %146 : vector<8x1xf32> to vector<8x128xf32>
    %148 = arith.mulf %147, %145 : vector<8x128xf32>
    %cst_60 = arith.constant 1.000000e+00 : f32
    %149 = vector.broadcast %cst_60 : f32 to vector<8x1xf32>
    %150 = arith.subf %149, %146 : vector<8x1xf32>
    %151 = vector.broadcast %150 : vector<8x1xf32> to vector<8x128xf32>
    %152 = arith.mulf %151, %124 : vector<8x128xf32>
    %153 = arith.addf %148, %152 : vector<8x128xf32>
    %c40 = arith.constant 40 : index
    %c0_61 = arith.constant 0 : index
    %154 = vector.load %arg8[%c40, %c0_61] : memref<64x256xf32, #tpu.memory_space<vmem>>, vector<8x256xf32>
    %155 = arith.truncf %153 : vector<8x128xf32> to vector<8x128xbf16>
    %c0_62 = arith.constant 0 : index
    %c0_63 = arith.constant 0 : index
    %156 = vector.load %arg4[%c0_62, %c0_63] : memref<128x256xbf16, #tpu.memory_space<vmem>>, vector<128x256xbf16>
    %cst_64 = arith.constant dense<0.000000e+00> : vector<8x256xf32>
    %157 = tpu.matmul %155, %156, %cst_64 {dimension_numbers = #tpu.dot_dimension_numbers<[1], [0], [0], [1], [0, 0, 1, 1], [], []>} : vector<8x128xbf16>, vector<128x256xbf16>, vector<8x256xf32> -> vector<8x256xf32>
    %158 = vector.extract_strided_slice %154 {offsets = [0, 0], sizes = [8, 128], strides = [1, 1]} : vector<8x256xf32> to vector<8x128xf32>
    %159 = vector.extract_strided_slice %157 {offsets = [0, 0], sizes = [8, 128], strides = [1, 1]} : vector<8x256xf32> to vector<8x128xf32>
    %160 = arith.addf %158, %159 : vector<8x128xf32>
    %cst_65 = arith.constant 0.000000e+00 : f32
    %161 = vector.broadcast %cst_65 : f32 to vector<8x128xf32>
    %162 = arith.subf %161, %160 : vector<8x128xf32>
    %163 = math.exp %162 : vector<8x128xf32>
    %cst_66 = arith.constant 1.000000e+00 : f32
    %164 = vector.broadcast %cst_66 : f32 to vector<8x128xf32>
    %165 = arith.addf %164, %163 : vector<8x128xf32>
    %166 = tpu.reciprocal %165 {approx = true} : vector<8x128xf32> -> vector<8x128xf32>
    %167 = vector.extract_strided_slice %154 {offsets = [0, 128], sizes = [8, 128], strides = [1, 1]} : vector<8x256xf32> to vector<8x128xf32>
    %168 = vector.extract_strided_slice %157 {offsets = [0, 128], sizes = [8, 128], strides = [1, 1]} : vector<8x256xf32> to vector<8x128xf32>
    %c0_67 = arith.constant 0 : index
    %c0_68 = arith.constant 0 : index
    %169 = vector.load %arg6[%c0_67, %c0_68] : memref<1x128xf32, #tpu.memory_space<vmem>>, vector<1x128xf32>
    %170 = vector.broadcast %169 : vector<1x128xf32> to vector<8x128xf32>
    %171 = arith.addf %168, %170 : vector<8x128xf32>
    %172 = arith.mulf %166, %171 : vector<8x128xf32>
    %173 = arith.addf %167, %172 : vector<8x128xf32>
    %174 = math.tanh %173 : vector<8x128xf32>
    %c0_69 = arith.constant 0 : index
    %c5 = arith.constant 5 : index
    %175 = vector.load %arg2[%c0_69, %c5] : memref<8x8xf32, #tpu.memory_space<vmem>>, vector<8x1xf32>
    %176 = vector.broadcast %175 : vector<8x1xf32> to vector<8x128xf32>
    %177 = arith.mulf %176, %174 : vector<8x128xf32>
    %cst_70 = arith.constant 1.000000e+00 : f32
    %178 = vector.broadcast %cst_70 : f32 to vector<8x1xf32>
    %179 = arith.subf %178, %175 : vector<8x1xf32>
    %180 = vector.broadcast %179 : vector<8x1xf32> to vector<8x128xf32>
    %181 = arith.mulf %180, %153 : vector<8x128xf32>
    %182 = arith.addf %177, %181 : vector<8x128xf32>
    %c48 = arith.constant 48 : index
    %c0_71 = arith.constant 0 : index
    %183 = vector.load %arg8[%c48, %c0_71] : memref<64x256xf32, #tpu.memory_space<vmem>>, vector<8x256xf32>
    %184 = arith.truncf %182 : vector<8x128xf32> to vector<8x128xbf16>
    %c0_72 = arith.constant 0 : index
    %c0_73 = arith.constant 0 : index
    %185 = vector.load %arg4[%c0_72, %c0_73] : memref<128x256xbf16, #tpu.memory_space<vmem>>, vector<128x256xbf16>
    %cst_74 = arith.constant dense<0.000000e+00> : vector<8x256xf32>
    %186 = tpu.matmul %184, %185, %cst_74 {dimension_numbers = #tpu.dot_dimension_numbers<[1], [0], [0], [1], [0, 0, 1, 1], [], []>} : vector<8x128xbf16>, vector<128x256xbf16>, vector<8x256xf32> -> vector<8x256xf32>
    %187 = vector.extract_strided_slice %183 {offsets = [0, 0], sizes = [8, 128], strides = [1, 1]} : vector<8x256xf32> to vector<8x128xf32>
    %188 = vector.extract_strided_slice %186 {offsets = [0, 0], sizes = [8, 128], strides = [1, 1]} : vector<8x256xf32> to vector<8x128xf32>
    %189 = arith.addf %187, %188 : vector<8x128xf32>
    %cst_75 = arith.constant 0.000000e+00 : f32
    %190 = vector.broadcast %cst_75 : f32 to vector<8x128xf32>
    %191 = arith.subf %190, %189 : vector<8x128xf32>
    %192 = math.exp %191 : vector<8x128xf32>
    %cst_76 = arith.constant 1.000000e+00 : f32
    %193 = vector.broadcast %cst_76 : f32 to vector<8x128xf32>
    %194 = arith.addf %193, %192 : vector<8x128xf32>
    %195 = tpu.reciprocal %194 {approx = true} : vector<8x128xf32> -> vector<8x128xf32>
    %196 = vector.extract_strided_slice %183 {offsets = [0, 128], sizes = [8, 128], strides = [1, 1]} : vector<8x256xf32> to vector<8x128xf32>
    %197 = vector.extract_strided_slice %186 {offsets = [0, 128], sizes = [8, 128], strides = [1, 1]} : vector<8x256xf32> to vector<8x128xf32>
    %c0_77 = arith.constant 0 : index
    %c0_78 = arith.constant 0 : index
    %198 = vector.load %arg6[%c0_77, %c0_78] : memref<1x128xf32, #tpu.memory_space<vmem>>, vector<1x128xf32>
    %199 = vector.broadcast %198 : vector<1x128xf32> to vector<8x128xf32>
    %200 = arith.addf %197, %199 : vector<8x128xf32>
    %201 = arith.mulf %195, %200 : vector<8x128xf32>
    %202 = arith.addf %196, %201 : vector<8x128xf32>
    %203 = math.tanh %202 : vector<8x128xf32>
    %c0_79 = arith.constant 0 : index
    %c6 = arith.constant 6 : index
    %204 = vector.load %arg2[%c0_79, %c6] : memref<8x8xf32, #tpu.memory_space<vmem>>, vector<8x1xf32>
    %205 = vector.broadcast %204 : vector<8x1xf32> to vector<8x128xf32>
    %206 = arith.mulf %205, %203 : vector<8x128xf32>
    %cst_80 = arith.constant 1.000000e+00 : f32
    %207 = vector.broadcast %cst_80 : f32 to vector<8x1xf32>
    %208 = arith.subf %207, %204 : vector<8x1xf32>
    %209 = vector.broadcast %208 : vector<8x1xf32> to vector<8x128xf32>
    %210 = arith.mulf %209, %182 : vector<8x128xf32>
    %211 = arith.addf %206, %210 : vector<8x128xf32>
    %c56 = arith.constant 56 : index
    %c0_81 = arith.constant 0 : index
    %212 = vector.load %arg8[%c56, %c0_81] : memref<64x256xf32, #tpu.memory_space<vmem>>, vector<8x256xf32>
    %213 = arith.truncf %211 : vector<8x128xf32> to vector<8x128xbf16>
    %c0_82 = arith.constant 0 : index
    %c0_83 = arith.constant 0 : index
    %214 = vector.load %arg4[%c0_82, %c0_83] : memref<128x256xbf16, #tpu.memory_space<vmem>>, vector<128x256xbf16>
    %cst_84 = arith.constant dense<0.000000e+00> : vector<8x256xf32>
    %215 = tpu.matmul %213, %214, %cst_84 {dimension_numbers = #tpu.dot_dimension_numbers<[1], [0], [0], [1], [0, 0, 1, 1], [], []>} : vector<8x128xbf16>, vector<128x256xbf16>, vector<8x256xf32> -> vector<8x256xf32>
    %216 = vector.extract_strided_slice %212 {offsets = [0, 0], sizes = [8, 128], strides = [1, 1]} : vector<8x256xf32> to vector<8x128xf32>
    %217 = vector.extract_strided_slice %215 {offsets = [0, 0], sizes = [8, 128], strides = [1, 1]} : vector<8x256xf32> to vector<8x128xf32>
    %218 = arith.addf %216, %217 : vector<8x128xf32>
    %cst_85 = arith.constant 0.000000e+00 : f32
    %219 = vector.broadcast %cst_85 : f32 to vector<8x128xf32>
    %220 = arith.subf %219, %218 : vector<8x128xf32>
    %221 = math.exp %220 : vector<8x128xf32>
    %cst_86 = arith.constant 1.000000e+00 : f32
    %222 = vector.broadcast %cst_86 : f32 to vector<8x128xf32>
    %223 = arith.addf %222, %221 : vector<8x128xf32>
    %224 = tpu.reciprocal %223 {approx = true} : vector<8x128xf32> -> vector<8x128xf32>
    %225 = vector.extract_strided_slice %212 {offsets = [0, 128], sizes = [8, 128], strides = [1, 1]} : vector<8x256xf32> to vector<8x128xf32>
    %226 = vector.extract_strided_slice %215 {offsets = [0, 128], sizes = [8, 128], strides = [1, 1]} : vector<8x256xf32> to vector<8x128xf32>
    %c0_87 = arith.constant 0 : index
    %c0_88 = arith.constant 0 : index
    %227 = vector.load %arg6[%c0_87, %c0_88] : memref<1x128xf32, #tpu.memory_space<vmem>>, vector<1x128xf32>
    %228 = vector.broadcast %227 : vector<1x128xf32> to vector<8x128xf32>
    %229 = arith.addf %226, %228 : vector<8x128xf32>
    %230 = arith.mulf %224, %229 : vector<8x128xf32>
    %231 = arith.addf %225, %230 : vector<8x128xf32>
    %232 = math.tanh %231 : vector<8x128xf32>
    %c0_89 = arith.constant 0 : index
    %c7 = arith.constant 7 : index
    %233 = vector.load %arg2[%c0_89, %c7] : memref<8x8xf32, #tpu.memory_space<vmem>>, vector<8x1xf32>
    %234 = vector.broadcast %233 : vector<8x1xf32> to vector<8x128xf32>
    %235 = arith.mulf %234, %232 : vector<8x128xf32>
    %cst_90 = arith.constant 1.000000e+00 : f32
    %236 = vector.broadcast %cst_90 : f32 to vector<8x1xf32>
    %237 = arith.subf %236, %233 : vector<8x1xf32>
    %238 = vector.broadcast %237 : vector<8x1xf32> to vector<8x128xf32>
    %239 = arith.mulf %238, %211 : vector<8x128xf32>
    %240 = arith.addf %235, %239 : vector<8x128xf32>
    %c0_91 = arith.constant 0 : index
    %c0_92 = arith.constant 0 : index
    %241 = vector.load %arg7[%c0_91, %c0_92] : memref<8x128xf32, #tpu.memory_space<vmem>>, vector<8x128xf32>
    tpu.vector_store %arg7[%c0_91, %c0_92], %240 {strides = array<i32>} : memref<8x128xf32, #tpu.memory_space<vmem>>, vector<8x128xf32>,
    return
  }
  func.func @transform_0(%arg0: i32) -> (i32, i32, i32) {
    %c0_i32 = arith.constant 0 : i32
    %c0_i32_0 = arith.constant 0 : i32
    %c0_i32_1 = arith.constant 0 : i32
    %c0_i32_2 = arith.constant 0 : i32
    return %c0_i32, %c0_i32_0, %c0_i32_1 : i32, i32, i32
  }
  func.func @transform_1(%arg0: i32) -> (i32, i32) {
    %c0_i32 = arith.constant 0 : i32
    %c0_i32_0 = arith.constant 0 : i32
    %c0_i32_1 = arith.constant 0 : i32
    return %c0_i32, %c0_i32_0 : i32, i32
  }
  func.func @transform_2(%arg0: i32) -> (i32, i32) {
    %c0_i32 = arith.constant 0 : i32
    %c0_i32_0 = arith.constant 0 : i32
    %c0_i32_1 = arith.constant 0 : i32
    return %c0_i32, %c0_i32_0 : i32, i32
  }
  func.func @transform_3(%arg0: i32) -> (i32, i32) {
    %c0_i32 = arith.constant 0 : i32
    %c0_i32_0 = arith.constant 0 : i32
    %c0_i32_1 = arith.constant 0 : i32
    return %c0_i32, %c0_i32_0 : i32, i32
  }
  func.func @transform_4(%arg0: i32) -> (i32, i32) {
    %c0_i32 = arith.constant 0 : i32
    %c0_i32_0 = arith.constant 0 : i32
    %c0_i32_1 = arith.constant 0 : i32
    return %c0_i32, %c0_i32_0 : i32, i32
  }
  func.func @transform_5(%arg0: i32) -> (i32, i32) {
    %c0_i32 = arith.constant 0 : i32
    %c0_i32_0 = arith.constant 0 : i32
    %c0_i32_1 = arith.constant 0 : i32
    return %c0_i32, %c0_i32_0 : i32, i32
  }
  func.func @transform_6(%arg0: i32) -> (i32, i32) {
    %c0_i32 = arith.constant 0 : i32
    %c0_i32_0 = arith.constant 0 : i32
    %c0_i32_1 = arith.constant 0 : i32
    return %c0_i32, %c0_i32_0 : i32, i32
  }
}

</mosaic_0001>

<llo_original>
// kernel: attention_gru.1
$region0: #{attention_gru.1}
  #allocation0 [shape = 'u32[]', space=smem, size = 0x4, offset = 0x4, fixed_abs, tag = 'smem constant byte address 0x4 - core index']
  #allocation1 [shape = 'u32[144,128]{1,0:T(1,128)}', space=vmem, size = 0x12000, scoped, tag = 'internal scratch']
  #allocation2 [shape = 'f32[64,256]{1,0:T(8,128)}', space=vmem, size = 0x10000, scoped, tag = 'scratch operand']
  %s0 = inlined_call_operand.vmem [shape: bf16[8,8,128], index: 0, kind: input, shape index: {}]
  %s1 = inlined_call_operand.vmem [shape: f32[8,8], index: 1, kind: input, shape index: {}]
  %s2 = inlined_call_operand.hbm [shape: bf16[128,256], index: 2, kind: input, shape index: {}]
  %s3 = inlined_call_operand.hbm [shape: bf16[128,256], index: 3, kind: input, shape index: {}]
  %s4 = inlined_call_operand.vmem [shape: f32[1,256], index: 4, kind: input, shape index: {}]
  %s5 = inlined_call_operand.vmem [shape: f32[1,128], index: 5, kind: input, shape index: {}]
  %s6 = inlined_call_operand.hbm [shape: f32[8,128], index: 6, kind: output, shape index: {}]
  %s7 = sld [smem:[#allocation0]]
  $region42: #{attention_gru.1} parent=0
    _
  %s9 = ssub.s32 1, %s7
  %s10 = scalar_select 0, %s9, %s7
  $region1: #{attention_gru.1} parent=0
    #allocation3 [shape = 'u8[65536]{0}', space=vmem, size = 0x10000, scoped, tag = 'input window, operand 2, single buffered']
    #allocation4 [shape = 's32[1]{0}', space=sflag, size = 0x4, scoped, tag = 'scoped memory for attention_gru.1']
    #allocation5 [shape = 's32[1]{0}', space=sflag, size = 0x4, scoped, tag = 'scoped memory for attention_gru.1']
    #allocation6 [shape = 'u8[65536]{0}', space=vmem, size = 0x10000, scoped, tag = 'input window, operand 3, single buffered']
    #allocation7 [shape = 's32[1]{0}', space=sflag, size = 0x4, scoped, tag = 'scoped memory for attention_gru.1']
    #allocation8 [shape = 'u8[4096]{0}', space=vmem, size = 0x1000, scoped, tag = 'output window, operand 0, single buffered']
    %11 = vsyncpa [#allocation4], 0
    %12 = vsyncpa [#allocation7], 0
    %13 = vsyncpa [#allocation5], 0
    // Predicated region
    $region2: #{attention_gru.1} parent=1 // pred_check
      _
    $region3: #{attention_gru.1} parent=1 // pred_check_branch
      %15 = sbr.rel (0) target = $region5
    $region4: #{attention_gru.1} parent=1 // pred_region
      _
    $region5: #{attention_gru.1} parent=1 // pred_fallthru
      _
    // Predicated region
    $region6: #{attention_gru.1} parent=1 // pred_check
      _
    $region7: #{attention_gru.1} parent=1 // pred_check_branch
      %17 = sbr.rel (0) target = $region9
    $region8: #{attention_gru.1} parent=1 // pred_region
      _
    $region9: #{attention_gru.1} parent=1 // pred_fallthru
      _
    // Predicated region
    $region10: #{attention_gru.1} parent=1 // pred_check
      _
    $region11: #{attention_gru.1} parent=1 // pred_check_branch
      %19 = sbr.rel (0) target = $region13
    $region12: #{attention_gru.1} parent=1 // pred_region
      %s21 = ssub.s32 2048, 2048
      %22 = vsyncadd [#allocation4], %s21
      %s23 = sshll.u32 [#allocation3], 4
      %s24 = int_to_ptr.vmem [resolvable:$true] %s23
      %29 = dma.hbm_to_vmem [thread:$0]  %s2, 2048, %s24, [#allocation4], 128, 128, 8
    $region13: #{attention_gru.1} parent=1 // pred_fallthru
      _
    // Predicated region
    $region14: #{attention_gru.1} parent=1 // pred_check
      _
    $region15: #{attention_gru.1} parent=1 // pred_check_branch
      %31 = sbr.rel (0) target = $region17
    $region16: #{attention_gru.1} parent=1 // pred_region
      %s33 = ssub.s32 2048, 2048
      %34 = vsyncadd [#allocation7], %s33
      %s35 = sshll.u32 [#allocation6], 4
      %s36 = int_to_ptr.vmem [resolvable:$true] %s35
      %41 = dma.hbm_to_vmem [thread:$0]  %s3, 2048, %s36, [#allocation7], 128, 128, 8
    $region17: #{attention_gru.1} parent=1 // pred_fallthru
      _
    // Predicated region
    $region18: #{attention_gru.1} parent=1 // pred_check
      _
    $region19: #{attention_gru.1} parent=1 // pred_check_branch
      %43 = sbr.rel (0) target = $region21
    $region20: #{attention_gru.1} parent=1 // pred_region
      _
    $region21: #{attention_gru.1} parent=1 // pred_fallthru
      _
    // Predicated region
    $region22: #{attention_gru.1} parent=1 // pred_check
      _
    $region23: #{attention_gru.1} parent=1 // pred_check_branch
      %45 = sbr.rel (0) target = $region25
    $region24: #{attention_gru.1} parent=1 // pred_region
      _
    $region25: #{attention_gru.1} parent=1 // pred_fallthru
      _
    // Predicated region
    $region26: #{attention_gru.1} parent=1 // pred_check
      _
    $region27: #{attention_gru.1} parent=1 // pred_check_branch
      %47 = sbr.rel (0) target = $region29
    $region28: #{attention_gru.1} parent=1 // pred_region
      %48 = dma.done [#allocation4], 2048
    $region29: #{attention_gru.1} parent=1 // pred_fallthru
      _
    // Predicated region
    $region30: #{attention_gru.1} parent=1 // pred_check
      _
    $region31: #{attention_gru.1} parent=1 // pred_check_branch
      %50 = sbr.rel (0) target = $region33
    $region32: #{attention_gru.1} parent=1 // pred_region
      %51 = dma.done [#allocation7], 2048
    $region33: #{attention_gru.1} parent=1 // pred_fallthru
      _
    %v53 = vld [vmem:[%s0] sm:$0xf]
    %v54 = vld [vmem:[%s0 + $0x4] sm:$0xf]
    %v55 = vld [vmem:[%s0 + $0x8] sm:$0xf]
    %v56 = vld [vmem:[%s0 + $0xc] sm:$0xf]
    %v57 = vld [vmem:[%s0 + $0x10] sm:$0xf]
    %v58 = vld [vmem:[%s0 + $0x14] sm:$0xf]
    %v59 = vld [vmem:[%s0 + $0x18] sm:$0xf]
    %v60 = vld [vmem:[%s0 + $0x1c] sm:$0xf]
    %v61 = vld [vmem:[#allocation3] sm:$0xff]
    %v62 = vld [vmem:[#allocation3 + $0x8] sm:$0xff]
    %v63 = vld [vmem:[#allocation3 + $0x10] sm:$0xff]
    %v64 = vld [vmem:[#allocation3 + $0x18] sm:$0xff]
    %v65 = vld [vmem:[#allocation3 + $0x20] sm:$0xff]
    %v66 = vld [vmem:[#allocation3 + $0x28] sm:$0xff]
    %v67 = vld [vmem:[#allocation3 + $0x30] sm:$0xff]
    %v68 = vld [vmem:[#allocation3 + $0x38] sm:$0xff]
    %v69 = vld [vmem:[#allocation3 + $0x40] sm:$0xff]
    %v70 = vld [vmem:[#allocation3 + $0x48] sm:$0xff]
    %v71 = vld [vmem:[#allocation3 + $0x50] sm:$0xff]
    %v72 = vld [vmem:[#allocation3 + $0x58] sm:$0xff]
    %v73 = vld [vmem:[#allocation3 + $0x60] sm:$0xff]
    %v74 = vld [vmem:[#allocation3 + $0x68] sm:$0xff]
    %v75 = vld [vmem:[#allocation3 + $0x70] sm:$0xff]
    %v76 = vld [vmem:[#allocation3 + $0x78] sm:$0xff]
    %v77 = vld [vmem:[%s4] sm:$0x3]
    %v79 = vlaneseq
    %v80 = vshrl.u32 %v79, 7
    %v81 = vsub.s32 0, %v80
    %v82 = vrot.slane %v77, %v81
    %v83 = vlaneseq
    %v84 = vshrl.u32 %v83, 7
    %v85 = vsub.s32 1, %v84
    %v86 = vrot.slane %v77, %v85
    %v97 = vunpack.c.l.b16 %v53
    %v98 = vunpack.c.l.b16 %v54
    %v99 = vunpack.c.l.b16 %v55
    %v100 = vunpack.c.l.b16 %v56
    %v101 = vunpack.c.l.b16 %v57
    %v102 = vunpack.c.l.b16 %v58
    %v103 = vunpack.c.l.b16 %v59
    %v104 = vunpack.c.l.b16 %v60
    %v105 = vpack.c.b16 %v98, %v97
    %v106 = vpack.c.b16 %v100, %v99
    %v107 = vpack.c.b16 %v102, %v101
    %v108 = vpack.c.b16 %v104, %v103
    %v129 = vunpack.c.l.b16 %v61
    %v130 = vunpack.c.h.b16 %v61
    %v131 = vunpack.c.l.b16 %v62
    %v132 = vunpack.c.h.b16 %v62
    %v133 = vunpack.c.l.b16 %v63
    %v134 = vunpack.c.h.b16 %v63
    %v135 = vunpack.c.l.b16 %v64
    %v136 = vunpack.c.h.b16 %v64
    %v137 = vunpack.c.l.b16 %v65
    %v138 = vunpack.c.h.b16 %v65
    %v139 = vunpack.c.l.b16 %v66
    %v140 = vunpack.c.h.b16 %v66
    %v141 = vunpack.c.l.b16 %v67
    %v142 = vunpack.c.h.b16 %v67
    %v143 = vunpack.c.l.b16 %v68
    %v144 = vunpack.c.h.b16 %v68
    %v145 = vunpack.c.l.b16 %v69
    %v146 = vunpack.c.h.b16 %v69
    %v147 = vunpack.c.l.b16 %v70
    %v148 = vunpack.c.h.b16 %v70
    %v149 = vunpack.c.l.b16 %v71
    %v150 = vunpack.c.h.b16 %v71
    %v151 = vunpack.c.l.b16 %v72
    %v152 = vunpack.c.h.b16 %v72
    %v153 = vunpack.c.l.b16 %v73
    %v154 = vunpack.c.h.b16 %v73
    %v155 = vunpack.c.l.b16 %v74
    %v156 = vunpack.c.h.b16 %v74
    %v157 = vunpack.c.l.b16 %v75
    %v158 = vunpack.c.h.b16 %v75
    %v159 = vunpack.c.l.b16 %v76
    %v160 = vunpack.c.h.b16 %v76
    %v161 = vpack.c.b16 %v131, %v129
    %v162 = vpack.c.b16 %v132, %v130
    %v163 = vpack.c.b16 %v135, %v133
    %v164 = vpack.c.b16 %v136, %v134
    %v165 = vpack.c.b16 %v139, %v137
    %v166 = vpack.c.b16 %v140, %v138
    %v167 = vpack.c.b16 %v143, %v141
    %v168 = vpack.c.b16 %v144, %v142
    %v169 = vpack.c.b16 %v147, %v145
    %v170 = vpack.c.b16 %v148, %v146
    %v171 = vpack.c.b16 %v151, %v149
    %v172 = vpack.c.b16 %v152, %v150
    %v173 = vpack.c.b16 %v155, %v153
    %v174 = vpack.c.b16 %v156, %v154
    %v175 = vpack.c.b16 %v159, %v157
    %v176 = vpack.c.b16 %v160, %v158
    %193 = vmatprep.subr.bf16.mxu0 %v162
    %194 = vmatpush1.bf16.msra.mxu0 %v161
    %195 = vmatprep.subr.bf16.mxu0 %v164
    %196 = vmatpush1.bf16.msra.mxu0 %v163
    %197 = vmatprep.subr.bf16.mxu0 %v166
    %198 = vmatpush1.bf16.msra.mxu0 %v165
    %199 = vmatprep.subr.bf16.mxu0 %v168
    %200 = vmatpush1.bf16.msra.mxu0 %v167
    %201 = vmatprep.subr.bf16.mxu0 %v170
    %202 = vmatpush1.bf16.msra.mxu0 %v169
    %203 = vmatprep.subr.bf16.mxu0 %v172
    %204 = vmatpush1.bf16.msra.mxu0 %v171
    %205 = vmatprep.subr.bf16.mxu0 %v174
    %206 = vmatpush1.bf16.msra.mxu0 %v173
    %207 = vmatprep.subr.bf16.mxu0 %v176
    %208 = vmatpush1.bf16.msra.mxu0 %v175
    %209 = vmatprep.subr.bf16.mxu0 0
    %210 = vmatpush1.bf16.msra.mxu0 0
    %211 = vmatprep.subr.bf16.mxu0 0
    %212 = vmatpush1.bf16.msra.mxu0 0
    %213 = vmatprep.subr.bf16.mxu0 0
    %214 = vmatpush1.bf16.msra.mxu0 0
    %215 = vmatprep.subr.bf16.mxu0 0
    %216 = vmatpush1.bf16.msra.mxu0 0
    %217 = vmatprep.subr.bf16.mxu0 0
    %218 = vmatpush1.bf16.msra.mxu0 0
    %219 = vmatprep.subr.bf16.mxu0 0
    %220 = vmatpush1.bf16.msra.mxu0 0
    %221 = vmatprep.subr.bf16.mxu0 0
    %222 = vmatpush1.bf16.msra.mxu0 0
    %223 = vmatprep.subr.bf16.mxu0 0
    %224 = vmatpush1.bf16.msra.mxu0 0
    %225 = vmatprep.mubr.bf16.mxu0 0
    %226 = vmatmul.mubr.bf16.gmra.mrb[0].mxu0 %v105
    %v227 = vpop.f32.mrb[0].mxu0
    %v228 = vadd.f32 %v82, %v227
    %v229 = vpop.f32.mrb[0].mxu0
    %v230 = vadd.f32 %v86, %v229
    %v231 = vpop.f32.mrb[0].mxu0
    %v232 = vadd.f32 %v82, %v231
    %v233 = vpop.f32.mrb[0].mxu0
    %v234 = vadd.f32 %v86, %v233
    %235 = vmatprep.mubr.bf16.mxu0 0
    %236 = vmatmul.mubr.bf16.gmra.mrb[0].mxu0 %v106
    %v237 = vpop.f32.mrb[0].mxu0
    %v238 = vadd.f32 %v82, %v237
    %v239 = vpop.f32.mrb[0].mxu0
    %v240 = vadd.f32 %v86, %v239
    %v241 = vpop.f32.mrb[0].mxu0
    %v242 = vadd.f32 %v82, %v241
    %v243 = vpop.f32.mrb[0].mxu0
    %v244 = vadd.f32 %v86, %v243
    %245 = vmatprep.mubr.bf16.mxu0 0
    %246 = vmatmul.mubr.bf16.gmra.mrb[0].mxu0 %v107
    %v247 = vpop.f32.mrb[0].mxu0
    %v248 = vadd.f32 %v82, %v247
    %v249 = vpop.f32.mrb[0].mxu0
    %v250 = vadd.f32 %v86, %v249
    %v251 = vpop.f32.mrb[0].mxu0
    %v252 = vadd.f32 %v82, %v251
    %v253 = vpop.f32.mrb[0].mxu0
    %v254 = vadd.f32 %v86, %v253
    %255 = vmatprep.mubr.bf16.mxu0 0
    %256 = vmatmul.mubr.bf16.gmra.mrb[0].mxu0 %v108
    %v257 = vpop.f32.mrb[0].mxu0
    %v258 = vadd.f32 %v82, %v257
    %v259 = vpop.f32.mrb[0].mxu0
    %v260 = vadd.f32 %v86, %v259
    %v261 = vpop.f32.mrb[0].mxu0
    %v262 = vadd.f32 %v82, %v261
    %v263 = vpop.f32.mrb[0].mxu0
    %v264 = vadd.f32 %v86, %v263
    %265 = vdwg.mxu0
    %266 = vst [vmem:[#allocation2] sm:$0xff] %v228
    %267 = vst [vmem:[#allocation2 + $0x8] sm:$0xff] %v230
    %268 = vst [vmem:[#allocation2 + $0x10] sm:$0xff] %v232
    %269 = vst [vmem:[#allocation2 + $0x18] sm:$0xff] %v234
    %270 = vst [vmem:[#allocation2 + $0x20] sm:$0xff] %v238
    %271 = vst [vmem:[#allocation2 + $0x28] sm:$0xff] %v240
    %272 = vst [vmem:[#allocation2 + $0x30] sm:$0xff] %v242
    %273 = vst [vmem:[#allocation2 + $0x38] sm:$0xff] %v244
    %274 = vst [vmem:[#allocation2 + $0x40] sm:$0xff] %v248
    %275 = vst [vmem:[#allocation2 + $0x48] sm:$0xff] %v250
    %276 = vst [vmem:[#allocation2 + $0x50] sm:$0xff] %v252
    %277 = vst [vmem:[#allocation2 + $0x58] sm:$0xff] %v254
    %278 = vst [vmem:[#allocation2 + $0x60] sm:$0xff] %v258
    %279 = vst [vmem:[#allocation2 + $0x68] sm:$0xff] %v260
    %280 = vst [vmem:[#allocation2 + $0x70] sm:$0xff] %v262
    %281 = vst [vmem:[#allocation2 + $0x78] sm:$0xff] %v264
    %v282 = vld [vmem:[#allocation2] sm:$0xff]
    %v283 = vld [vmem:[#allocation2 + $0x8] sm:$0xff]
    %v284 = vld [vmem:[#allocation6] sm:$0xff]
    %v285 = vld [vmem:[#allocation6 + $0x8] sm:$0xff]
    %v286 = vld [vmem:[#allocation6 + $0x10] sm:$0xff]
    %v287 = vld [vmem:[#allocation6 + $0x18] sm:$0xff]
    %v288 = vld [vmem:[#allocation6 + $0x20] sm:$0xff]
    %v289 = vld [vmem:[#allocation6 + $0x28] sm:$0xff]
    %v290 = vld [vmem:[#allocation6 + $0x30] sm:$0xff]
    %v291 = vld [vmem:[#allocation6 + $0x38] sm:$0xff]
    %v292 = vld [vmem:[#allocation6 + $0x40] sm:$0xff]
    %v293 = vld [vmem:[#allocation6 + $0x48] sm:$0xff]
    %v294 = vld [vmem:[#allocation6 + $0x50] sm:$0xff]
    %v295 = vld [vmem:[#allocation6 + $0x58] sm:$0xff]
    %v296 = vld [vmem:[#allocation6 + $0x60] sm:$0xff]
    %v297 = vld [vmem:[#allocation6 + $0x68] sm:$0xff]
    %v298 = vld [vmem:[#allocation6 + $0x70] sm:$0xff]
    %v299 = vld [vmem:[#allocation6 + $0x78] sm:$0xff]
    %v316 = vunpack.c.l.b16 %v284
    %v317 = vunpack.c.h.b16 %v284
    %v318 = vunpack.c.l.b16 %v285
    %v319 = vunpack.c.h.b16 %v285
    %v320 = vunpack.c.l.b16 %v286
    %v321 = vunpack.c.h.b16 %v286
    %v322 = vunpack.c.l.b16 %v287
    %v323 = vunpack.c.h.b16 %v287
    %v324 = vunpack.c.l.b16 %v288
    %v325 = vunpack.c.h.b16 %v288
    %v326 = vunpack.c.l.b16 %v289
    %v327 = vunpack.c.h.b16 %v289
    %v328 = vunpack.c.l.b16 %v290
    %v329 = vunpack.c.h.b16 %v290
    %v330 = vunpack.c.l.b16 %v291
    %v331 = vunpack.c.h.b16 %v291
    %v332 = vunpack.c.l.b16 %v292
    %v333 = vunpack.c.h.b16 %v292
    %v334 = vunpack.c.l.b16 %v293
    %v335 = vunpack.c.h.b16 %v293
    %v336 = vunpack.c.l.b16 %v294
    %v337 = vunpack.c.h.b16 %v294
    %v338 = vunpack.c.l.b16 %v295
    %v339 = vunpack.c.h.b16 %v295
    %v340 = vunpack.c.l.b16 %v296
    %v341 = vunpack.c.h.b16 %v296
    %v342 = vunpack.c.l.b16 %v297
    %v343 = vunpack.c.h.b16 %v297
    %v344 = vunpack.c.l.b16 %v298
    %v345 = vunpack.c.h.b16 %v298
    %v346 = vunpack.c.l.b16 %v299
    %v347 = vunpack.c.h.b16 %v299
    %v348 = vpack.c.b16 %v318, %v316
    %v349 = vpack.c.b16 %v319, %v317
    %v350 = vpack.c.b16 %v322, %v320
    %v351 = vpack.c.b16 %v323, %v321
    %v352 = vpack.c.b16 %v326, %v324
    %v353 = vpack.c.b16 %v327, %v325
    %v354 = vpack.c.b16 %v330, %v328
    %v355 = vpack.c.b16 %v331, %v329
    %v356 = vpack.c.b16 %v334, %v332
    %v357 = vpack.c.b16 %v335, %v333
    %v358 = vpack.c.b16 %v338, %v336
    %v359 = vpack.c.b16 %v339, %v337
    %v360 = vpack.c.b16 %v342, %v340
    %v361 = vpack.c.b16 %v343, %v341
    %v362 = vpack.c.b16 %v346, %v344
    %v363 = vpack.c.b16 %v347, %v345
    %380 = vmatprep.subr.bf16.mxu0 %v349
    %381 = vmatpush1.bf16.msra.mxu0 %v348
    %382 = vmatprep.subr.bf16.mxu0 %v351
    %383 = vmatpush1.bf16.msra.mxu0 %v350
    %384 = vmatprep.subr.bf16.mxu0 %v353
    %385 = vmatpush1.bf16.msra.mxu0 %v352
    %386 = vmatprep.subr.bf16.mxu0 %v355
    %387 = vmatpush1.bf16.msra.mxu0 %v354
    %388 = vmatprep.subr.bf16.mxu0 %v357
    %389 = vmatpush1.bf16.msra.mxu0 %v356
    %390 = vmatprep.subr.bf16.mxu0 %v359
    %391 = vmatpush1.bf16.msra.mxu0 %v358
    %392 = vmatprep.subr.bf16.mxu0 %v361
    %393 = vmatpush1.bf16.msra.mxu0 %v360
    %394 = vmatprep.subr.bf16.mxu0 %v363
    %395 = vmatpush1.bf16.msra.mxu0 %v362
    %396 = vmatprep.subr.bf16.mxu0 0
    %397 = vmatpush1.bf16.msra.mxu0 0
    %398 = vmatprep.subr.bf16.mxu0 0
    %399 = vmatpush1.bf16.msra.mxu0 0
    %400 = vmatprep.subr.bf16.mxu0 0
    %401 = vmatpush1.bf16.msra.mxu0 0
    %402 = vmatprep.subr.bf16.mxu0 0
    %403 = vmatpush1.bf16.msra.mxu0 0
    %404 = vmatprep.subr.bf16.mxu0 0
    %405 = vmatpush1.bf16.msra.mxu0 0
    %406 = vmatprep.subr.bf16.mxu0 0
    %407 = vmatpush1.bf16.msra.mxu0 0
    %408 = vmatprep.subr.bf16.mxu0 0
    %409 = vmatpush1.bf16.msra.mxu0 0
    %410 = vmatprep.subr.bf16.mxu0 0
    %411 = vmatpush1.bf16.msra.mxu0 0
    %412 = vmatprep.mubr.bf16.mxu0 0
    %413 = vmatmul.mubr.bf16.gmra.mrb[0].mxu0 0
    %v414 = vpop.f32.mrb[0].mxu0
    %v415 = vadd.f32 0.0, %v414
    %v416 = vpop.f32.mrb[0].mxu0
    %v417 = vadd.f32 0.0, %v416
    %v418 = vpop.f32.mrb[0].mxu0
    %v419 = vpop.f32.mrb[0].mxu0
    %420 = vdwg.mxu0
    %v421 = vadd.f32 %v282, %v415
    %v422 = vsub.f32 0.0, %v421
    %v423 = vmul.f32 %v422, 1.442695
    %v424 = vpow.pop %v423
    %v425 = vadd.f32 %v424, 1.0
    %v426 = vrcp.pop %v425
    %v427 = vld [vmem:[%s5] sm:$0x1]
    %v429 = vlaneseq
    %v430 = vshrl.u32 %v429, 7
    %v431 = vsub.s32 0, %v430
    %v432 = vrot.slane %v427, %v431
    %v434 = vadd.f32 %v417, %v432
    %v435 = vmul.f32 %v426, %v434
    %v436 = vadd.f32 %v283, %v435
    %v437 = vtanh.pop %v436
    %v438 = vld [vmem:[%s1] sm:$0xff]
    %440 = vset.pattern.permute.xlu0 0
    %441 = vperm.xlu0 %440, %v438
    %v442 = vpop.permute.xlu0 %441
    %v444 = vmul.f32 %v442, %v437
    %v445 = vsub.f32 1.0, %v438
    %447 = vset.pattern.permute.xlu0 0
    %448 = vperm.xlu0 %447, %v445
    %v449 = vpop.permute.xlu0 %448
    %v451 = vmul.f32 %v449, 0.0
    %v452 = vadd.f32 %v444, %v451
    %v453 = vld [vmem:[#allocation2 + $0x10] sm:$0xff]
    %v454 = vld [vmem:[#allocation2 + $0x18] sm:$0xff]
    %v455 = vpack.c.bf16 %v452, %v452
    %456 = vmatprep.subr.bf16.mxu0 %v349
    %457 = vmatpush1.bf16.msra.mxu0 %v348
    %458 = vmatprep.subr.bf16.mxu0 %v351
    %459 = vmatpush1.bf16.msra.mxu0 %v350
    %460 = vmatprep.subr.bf16.mxu0 %v353
    %461 = vmatpush1.bf16.msra.mxu0 %v352
    %462 = vmatprep.subr.bf16.mxu0 %v355
    %463 = vmatpush1.bf16.msra.mxu0 %v354
    %464 = vmatprep.subr.bf16.mxu0 %v357
    %465 = vmatpush1.bf16.msra.mxu0 %v356
    %466 = vmatprep.subr.bf16.mxu0 %v359
    %467 = vmatpush1.bf16.msra.mxu0 %v358
    %468 = vmatprep.subr.bf16.mxu0 %v361
    %469 = vmatpush1.bf16.msra.mxu0 %v360
    %470 = vmatprep.subr.bf16.mxu0 %v363
    %471 = vmatpush1.bf16.msra.mxu0 %v362
    %472 = vmatprep.subr.bf16.mxu0 0
    %473 = vmatpush1.bf16.msra.mxu0 0
    %474 = vmatprep.subr.bf16.mxu0 0
    %475 = vmatpush1.bf16.msra.mxu0 0
    %476 = vmatprep.subr.bf16.mxu0 0
    %477 = vmatpush1.bf16.msra.mxu0 0
    %478 = vmatprep.subr.bf16.mxu0 0
    %479 = vmatpush1.bf16.msra.mxu0 0
    %480 = vmatprep.subr.bf16.mxu0 0
    %481 = vmatpush1.bf16.msra.mxu0 0
    %482 = vmatprep.subr.bf16.mxu0 0
    %483 = vmatpush1.bf16.msra.mxu0 0
    %484 = vmatprep.subr.bf16.mxu0 0
    %485 = vmatpush1.bf16.msra.mxu0 0
    %486 = vmatprep.subr.bf16.mxu0 0
    %487 = vmatpush1.bf16.msra.mxu0 0
    %488 = vmatprep.mubr.bf16.mxu0 0
    %489 = vmatmul.mubr.bf16.gmra.mrb[0].mxu0 %v455
    %v490 = vpop.f32.mrb[0].mxu0
    %v491 = vadd.f32 0.0, %v490
    %v492 = vpop.f32.mrb[0].mxu0
    %v493 = vadd.f32 0.0, %v492
    %v494 = vpop.f32.mrb[0].mxu0
    %v495 = vpop.f32.mrb[0].mxu0
    %496 = vdwg.mxu0
    %v497 = vadd.f32 %v453, %v491
    %v498 = vsub.f32 0.0, %v497
    %v499 = vmul.f32 %v498, 1.442695
    %v500 = vpow.pop %v499
    %v501 = vadd.f32 %v500, 1.0
    %v502 = vrcp.pop %v501
    %v503 = vadd.f32 %v493, %v432
    %v504 = vmul.f32 %v502, %v503
    %v505 = vadd.f32 %v454, %v504
    %v506 = vtanh.pop %v505
    %507 = vset.pattern.permute.xlu0 1
    %508 = vperm.xlu0 %507, %v438
    %v509 = vpop.permute.xlu0 %508
    %v511 = vmul.f32 %v509, %v506
    %512 = vset.pattern.permute.xlu0 1
    %513 = vperm.xlu0 %512, %v445
    %v514 = vpop.permute.xlu0 %513
    %v516 = vmul.f32 %v514, %v452
    %v517 = vadd.f32 %v511, %v516
    %v518 = vld [vmem:[#allocation2 + $0x20] sm:$0xff]
    %v519 = vld [vmem:[#allocation2 + $0x28] sm:$0xff]
    %v520 = vpack.c.bf16 %v517, %v517
    %521 = vmatprep.subr.bf16.mxu0 %v349
    %522 = vmatpush1.bf16.msra.mxu0 %v348
    %523 = vmatprep.subr.bf16.mxu0 %v351
    %524 = vmatpush1.bf16.msra.mxu0 %v350
    %525 = vmatprep.subr.bf16.mxu0 %v353
    %526 = vmatpush1.bf16.msra.mxu0 %v352
    %527 = vmatprep.subr.bf16.mxu0 %v355
    %528 = vmatpush1.bf16.msra.mxu0 %v354
    %529 = vmatprep.subr.bf16.mxu0 %v357
    %530 = vmatpush1.bf16.msra.mxu0 %v356
    %531 = vmatprep.subr.bf16.mxu0 %v359
    %532 = vmatpush1.bf16.msra.mxu0 %v358
    %533 = vmatprep.subr.bf16.mxu0 %v361
    %534 = vmatpush1.bf16.msra.mxu0 %v360
    %535 = vmatprep.subr.bf16.mxu0 %v363
    %536 = vmatpush1.bf16.msra.mxu0 %v362
    %537 = vmatprep.subr.bf16.mxu0 0
    %538 = vmatpush1.bf16.msra.mxu0 0
    %539 = vmatprep.subr.bf16.mxu0 0
    %540 = vmatpush1.bf16.msra.mxu0 0
    %541 = vmatprep.subr.bf16.mxu0 0
    %542 = vmatpush1.bf16.msra.mxu0 0
    %543 = vmatprep.subr.bf16.mxu0 0
    %544 = vmatpush1.bf16.msra.mxu0 0
    %545 = vmatprep.subr.bf16.mxu0 0
    %546 = vmatpush1.bf16.msra.mxu0 0
    %547 = vmatprep.subr.bf16.mxu0 0
    %548 = vmatpush1.bf16.msra.mxu0 0
    %549 = vmatprep.subr.bf16.mxu0 0
    %550 = vmatpush1.bf16.msra.mxu0 0
    %551 = vmatprep.subr.bf16.mxu0 0
    %552 = vmatpush1.bf16.msra.mxu0 0
    %553 = vmatprep.mubr.bf16.mxu0 0
    %554 = vmatmul.mubr.bf16.gmra.mrb[0].mxu0 %v520
    %v555 = vpop.f32.mrb[0].mxu0
    %v556 = vadd.f32 0.0, %v555
    %v557 = vpop.f32.mrb[0].mxu0
    %v558 = vadd.f32 0.0, %v557
    %v559 = vpop.f32.mrb[0].mxu0
    %v560 = vpop.f32.mrb[0].mxu0
    %561 = vdwg.mxu0
    %v562 = vadd.f32 %v518, %v556
    %v563 = vsub.f32 0.0, %v562
    %v564 = vmul.f32 %v563, 1.442695
    %v565 = vpow.pop %v564
    %v566 = vadd.f32 %v565, 1.0
    %v567 = vrcp.pop %v566
    %v568 = vadd.f32 %v558, %v432
    %v569 = vmul.f32 %v567, %v568
    %v570 = vadd.f32 %v519, %v569
    %v571 = vtanh.pop %v570
    %572 = vset.pattern.permute.xlu0 2
    %573 = vperm.xlu0 %572, %v438
    %v574 = vpop.permute.xlu0 %573
    %v576 = vmul.f32 %v574, %v571
    %577 = vset.pattern.permute.xlu0 2
    %578 = vperm.xlu0 %577, %v445
    %v579 = vpop.permute.xlu0 %578
    %v581 = vmul.f32 %v579, %v517
    %v582 = vadd.f32 %v576, %v581
    %v583 = vld [vmem:[#allocation2 + $0x30] sm:$0xff]
    %v584 = vld [vmem:[#allocation2 + $0x38] sm:$0xff]
    %v585 = vpack.c.bf16 %v582, %v582
    %586 = vmatprep.subr.bf16.mxu0 %v349
    %587 = vmatpush1.bf16.msra.mxu0 %v348
    %588 = vmatprep.subr.bf16.mxu0 %v351
    %589 = vmatpush1.bf16.msra.mxu0 %v350
    %590 = vmatprep.subr.bf16.mxu0 %v353
    %591 = vmatpush1.bf16.msra.mxu0 %v352
    %592 = vmatprep.subr.bf16.mxu0 %v355
    %593 = vmatpush1.bf16.msra.mxu0 %v354
    %594 = vmatprep.subr.bf16.mxu0 %v357
    %595 = vmatpush1.bf16.msra.mxu0 %v356
    %596 = vmatprep.subr.bf16.mxu0 %v359
    %597 = vmatpush1.bf16.msra.mxu0 %v358
    %598 = vmatprep.subr.bf16.mxu0 %v361
    %599 = vmatpush1.bf16.msra.mxu0 %v360
    %600 = vmatprep.subr.bf16.mxu0 %v363
    %601 = vmatpush1.bf16.msra.mxu0 %v362
    %602 = vmatprep.subr.bf16.mxu0 0
    %603 = vmatpush1.bf16.msra.mxu0 0
    %604 = vmatprep.subr.bf16.mxu0 0
    %605 = vmatpush1.bf16.msra.mxu0 0
    %606 = vmatprep.subr.bf16.mxu0 0
    %607 = vmatpush1.bf16.msra.mxu0 0
    %608 = vmatprep.subr.bf16.mxu0 0
    %609 = vmatpush1.bf16.msra.mxu0 0
    %610 = vmatprep.subr.bf16.mxu0 0
    %611 = vmatpush1.bf16.msra.mxu0 0
    %612 = vmatprep.subr.bf16.mxu0 0
    %613 = vmatpush1.bf16.msra.mxu0 0
    %614 = vmatprep.subr.bf16.mxu0 0
    %615 = vmatpush1.bf16.msra.mxu0 0
    %616 = vmatprep.subr.bf16.mxu0 0
    %617 = vmatpush1.bf16.msra.mxu0 0
    %618 = vmatprep.mubr.bf16.mxu0 0
    %619 = vmatmul.mubr.bf16.gmra.mrb[0].mxu0 %v585
    %v620 = vpop.f32.mrb[0].mxu0
    %v621 = vadd.f32 0.0, %v620
    %v622 = vpop.f32.mrb[0].mxu0
    %v623 = vadd.f32 0.0, %v622
    %v624 = vpop.f32.mrb[0].mxu0
    %v625 = vpop.f32.mrb[0].mxu0
    %626 = vdwg.mxu0
    %v627 = vadd.f32 %v583, %v621
    %v628 = vsub.f32 0.0, %v627
    %v629 = vmul.f32 %v628, 1.442695
    %v630 = vpow.pop %v629
    %v631 = vadd.f32 %v630, 1.0
    %v632 = vrcp.pop %v631
    %v633 = vadd.f32 %v623, %v432
    %v634 = vmul.f32 %v632, %v633
    %v635 = vadd.f32 %v584, %v634
    %v636 = vtanh.pop %v635
    %637 = vset.pattern.permute.xlu0 3
    %638 = vperm.xlu0 %637, %v438
    %v639 = vpop.permute.xlu0 %638
    %v641 = vmul.f32 %v639, %v636
    %642 = vset.pattern.permute.xlu0 3
    %643 = vperm.xlu0 %642, %v445
    %v644 = vpop.permute.xlu0 %643
    %v646 = vmul.f32 %v644, %v582
    %v647 = vadd.f32 %v641, %v646
    %v648 = vld [vmem:[#allocation2 + $0x40] sm:$0xff]
    %v649 = vld [vmem:[#allocation2 + $0x48] sm:$0xff]
    %v650 = vpack.c.bf16 %v647, %v647
    %651 = vmatprep.subr.bf16.mxu0 %v349
    %652 = vmatpush1.bf16.msra.mxu0 %v348
    %653 = vmatprep.subr.bf16.mxu0 %v351
    %654 = vmatpush1.bf16.msra.mxu0 %v350
    %655 = vmatprep.subr.bf16.mxu0 %v353
    %656 = vmatpush1.bf16.msra.mxu0 %v352
    %657 = vmatprep.subr.bf16.mxu0 %v355
    %658 = vmatpush1.bf16.msra.mxu0 %v354
    %659 = vmatprep.subr.bf16.mxu0 %v357
    %660 = vmatpush1.bf16.msra.mxu0 %v356
    %661 = vmatprep.subr.bf16.mxu0 %v359
    %662 = vmatpush1.bf16.msra.mxu0 %v358
    %663 = vmatprep.subr.bf16.mxu0 %v361
    %664 = vmatpush1.bf16.msra.mxu0 %v360
    %665 = vmatprep.subr.bf16.mxu0 %v363
    %666 = vmatpush1.bf16.msra.mxu0 %v362
    %667 = vmatprep.subr.bf16.mxu0 0
    %668 = vmatpush1.bf16.msra.mxu0 0
    %669 = vmatprep.subr.bf16.mxu0 0
    %670 = vmatpush1.bf16.msra.mxu0 0
    %671 = vmatprep.subr.bf16.mxu0 0
    %672 = vmatpush1.bf16.msra.mxu0 0
    %673 = vmatprep.subr.bf16.mxu0 0
    %674 = vmatpush1.bf16.msra.mxu0 0
    %675 = vmatprep.subr.bf16.mxu0 0
    %676 = vmatpush1.bf16.msra.mxu0 0
    %677 = vmatprep.subr.bf16.mxu0 0
    %678 = vmatpush1.bf16.msra.mxu0 0
    %679 = vmatprep.subr.bf16.mxu0 0
    %680 = vmatpush1.bf16.msra.mxu0 0
    %681 = vmatprep.subr.bf16.mxu0 0
    %682 = vmatpush1.bf16.msra.mxu0 0
    %683 = vmatprep.mubr.bf16.mxu0 0
    %684 = vmatmul.mubr.bf16.gmra.mrb[0].mxu0 %v650
    %v685 = vpop.f32.mrb[0].mxu0
    %v686 = vadd.f32 0.0, %v685
    %v687 = vpop.f32.mrb[0].mxu0
    %v688 = vadd.f32 0.0, %v687
    %v689 = vpop.f32.mrb[0].mxu0
    %v690 = vpop.f32.mrb[0].mxu0
    %691 = vdwg.mxu0
    %v692 = vadd.f32 %v648, %v686
    %v693 = vsub.f32 0.0, %v692
    %v694 = vmul.f32 %v693, 1.442695
    %v695 = vpow.pop %v694
    %v696 = vadd.f32 %v695, 1.0
    %v697 = vrcp.pop %v696
    %v698 = vadd.f32 %v688, %v432
    %v699 = vmul.f32 %v697, %v698
    %v700 = vadd.f32 %v649, %v699
    %v701 = vtanh.pop %v700
    %702 = vset.pattern.permute.xlu0 4
    %703 = vperm.xlu0 %702, %v438
    %v704 = vpop.permute.xlu0 %703
    %v706 = vmul.f32 %v704, %v701
    %707 = vset.pattern.permute.xlu0 4
    %708 = vperm.xlu0 %707, %v445
    %v709 = vpop.permute.xlu0 %708
    %v711 = vmul.f32 %v709, %v647
    %v712 = vadd.f32 %v706, %v711
    %v713 = vld [vmem:[#allocation2 + $0x50] sm:$0xff]
    %v714 = vld [vmem:[#allocation2 + $0x58] sm:$0xff]
    %v715 = vpack.c.bf16 %v712, %v712
    %716 = vmatprep.subr.bf16.mxu0 %v349
    %717 = vmatpush1.bf16.msra.mxu0 %v348
    %718 = vmatprep.subr.bf16.mxu0 %v351
    %719 = vmatpush1.bf16.msra.mxu0 %v350
    %720 = vmatprep.subr.bf16.mxu0 %v353
    %721 = vmatpush1.bf16.msra.mxu0 %v352
    %722 = vmatprep.subr.bf16.mxu0 %v355
    %723 = vmatpush1.bf16.msra.mxu0 %v354
    %724 = vmatprep.subr.bf16.mxu0 %v357
    %725 = vmatpush1.bf16.msra.mxu0 %v356
    %726 = vmatprep.subr.bf16.mxu0 %v359
    %727 = vmatpush1.bf16.msra.mxu0 %v358
    %728 = vmatprep.subr.bf16.mxu0 %v361
    %729 = vmatpush1.bf16.msra.mxu0 %v360
    %730 = vmatprep.subr.bf16.mxu0 %v363
    %731 = vmatpush1.bf16.msra.mxu0 %v362
    %732 = vmatprep.subr.bf16.mxu0 0
    %733 = vmatpush1.bf16.msra.mxu0 0
    %734 = vmatprep.subr.bf16.mxu0 0
    %735 = vmatpush1.bf16.msra.mxu0 0
    %736 = vmatprep.subr.bf16.mxu0 0
    %737 = vmatpush1.bf16.msra.mxu0 0
    %738 = vmatprep.subr.bf16.mxu0 0
    %739 = vmatpush1.bf16.msra.mxu0 0
    %740 = vmatprep.subr.bf16.mxu0 0
    %741 = vmatpush1.bf16.msra.mxu0 0
    %742 = vmatprep.subr.bf16.mxu0 0
    %743 = vmatpush1.bf16.msra.mxu0 0
    %744 = vmatprep.subr.bf16.mxu0 0
    %745 = vmatpush1.bf16.msra.mxu0 0
    %746 = vmatprep.subr.bf16.mxu0 0
    %747 = vmatpush1.bf16.msra.mxu0 0
    %748 = vmatprep.mubr.bf16.mxu0 0
    %749 = vmatmul.mubr.bf16.gmra.mrb[0].mxu0 %v715
    %v750 = vpop.f32.mrb[0].mxu0
    %v751 = vadd.f32 0.0, %v750
    %v752 = vpop.f32.mrb[0].mxu0
    %v753 = vadd.f32 0.0, %v752
    %v754 = vpop.f32.mrb[0].mxu0
    %v755 = vpop.f32.mrb[0].mxu0
    %756 = vdwg.mxu0
    %v757 = vadd.f32 %v713, %v751
    %v758 = vsub.f32 0.0, %v757
    %v759 = vmul.f32 %v758, 1.442695
    %v760 = vpow.pop %v759
    %v761 = vadd.f32 %v760, 1.0
    %v762 = vrcp.pop %v761
    %v763 = vadd.f32 %v753, %v432
    %v764 = vmul.f32 %v762, %v763
    %v765 = vadd.f32 %v714, %v764
    %v766 = vtanh.pop %v765
    %767 = vset.pattern.permute.xlu0 5
    %768 = vperm.xlu0 %767, %v438
    %v769 = vpop.permute.xlu0 %768
    %v771 = vmul.f32 %v769, %v766
    %772 = vset.pattern.permute.xlu0 5
    %773 = vperm.xlu0 %772, %v445
    %v774 = vpop.permute.xlu0 %773
    %v776 = vmul.f32 %v774, %v712
    %v777 = vadd.f32 %v771, %v776
    %v778 = vld [vmem:[#allocation2 + $0x60] sm:$0xff]
    %v779 = vld [vmem:[#allocation2 + $0x68] sm:$0xff]
    %v780 = vpack.c.bf16 %v777, %v777
    %781 = vmatprep.subr.bf16.mxu0 %v349
    %782 = vmatpush1.bf16.msra.mxu0 %v348
    %783 = vmatprep.subr.bf16.mxu0 %v351
    %784 = vmatpush1.bf16.msra.mxu0 %v350
    %785 = vmatprep.subr.bf16.mxu0 %v353
    %786 = vmatpush1.bf16.msra.mxu0 %v352
    %787 = vmatprep.subr.bf16.mxu0 %v355
    %788 = vmatpush1.bf16.msra.mxu0 %v354
    %789 = vmatprep.subr.bf16.mxu0 %v357
    %790 = vmatpush1.bf16.msra.mxu0 %v356
    %791 = vmatprep.subr.bf16.mxu0 %v359
    %792 = vmatpush1.bf16.msra.mxu0 %v358
    %793 = vmatprep.subr.bf16.mxu0 %v361
    %794 = vmatpush1.bf16.msra.mxu0 %v360
    %795 = vmatprep.subr.bf16.mxu0 %v363
    %796 = vmatpush1.bf16.msra.mxu0 %v362
    %797 = vmatprep.subr.bf16.mxu0 0
    %798 = vmatpush1.bf16.msra.mxu0 0
    %799 = vmatprep.subr.bf16.mxu0 0
    %800 = vmatpush1.bf16.msra.mxu0 0
    %801 = vmatprep.subr.bf16.mxu0 0
    %802 = vmatpush1.bf16.msra.mxu0 0
    %803 = vmatprep.subr.bf16.mxu0 0
    %804 = vmatpush1.bf16.msra.mxu0 0
    %805 = vmatprep.subr.bf16.mxu0 0
    %806 = vmatpush1.bf16.msra.mxu0 0
    %807 = vmatprep.subr.bf16.mxu0 0
    %808 = vmatpush1.bf16.msra.mxu0 0
    %809 = vmatprep.subr.bf16.mxu0 0
    %810 = vmatpush1.bf16.msra.mxu0 0
    %811 = vmatprep.subr.bf16.mxu0 0
    %812 = vmatpush1.bf16.msra.mxu0 0
    %813 = vmatprep.mubr.bf16.mxu0 0
    %814 = vmatmul.mubr.bf16.gmra.mrb[0].mxu0 %v780
    %v815 = vpop.f32.mrb[0].mxu0
    %v816 = vadd.f32 0.0, %v815
    %v817 = vpop.f32.mrb[0].mxu0
    %v818 = vadd.f32 0.0, %v817
    %v819 = vpop.f32.mrb[0].mxu0
    %v820 = vpop.f32.mrb[0].mxu0
    %821 = vdwg.mxu0
    %v822 = vadd.f32 %v778, %v816
    %v823 = vsub.f32 0.0, %v822
    %v824 = vmul.f32 %v823, 1.442695
    %v825 = vpow.pop %v824
    %v826 = vadd.f32 %v825, 1.0
    %v827 = vrcp.pop %v826
    %v828 = vadd.f32 %v818, %v432
    %v829 = vmul.f32 %v827, %v828
    %v830 = vadd.f32 %v779, %v829
    %v831 = vtanh.pop %v830
    %832 = vset.pattern.permute.xlu0 6
    %833 = vperm.xlu0 %832, %v438
    %v834 = vpop.permute.xlu0 %833
    %v836 = vmul.f32 %v834, %v831
    %837 = vset.pattern.permute.xlu0 6
    %838 = vperm.xlu0 %837, %v445
    %v839 = vpop.permute.xlu0 %838
    %v841 = vmul.f32 %v839, %v777
    %v842 = vadd.f32 %v836, %v841
    %v843 = vld [vmem:[#allocation2 + $0x70] sm:$0xff]
    %v844 = vld [vmem:[#allocation2 + $0x78] sm:$0xff]
    %v845 = vpack.c.bf16 %v842, %v842
    %846 = vmatprep.subr.bf16.mxu0 %v349
    %847 = vmatpush1.bf16.msra.mxu0 %v348
    %848 = vmatprep.subr.bf16.mxu0 %v351
    %849 = vmatpush1.bf16.msra.mxu0 %v350
    %850 = vmatprep.subr.bf16.mxu0 %v353
    %851 = vmatpush1.bf16.msra.mxu0 %v352
    %852 = vmatprep.subr.bf16.mxu0 %v355
    %853 = vmatpush1.bf16.msra.mxu0 %v354
    %854 = vmatprep.subr.bf16.mxu0 %v357
    %855 = vmatpush1.bf16.msra.mxu0 %v356
    %856 = vmatprep.subr.bf16.mxu0 %v359
    %857 = vmatpush1.bf16.msra.mxu0 %v358
    %858 = vmatprep.subr.bf16.mxu0 %v361
    %859 = vmatpush1.bf16.msra.mxu0 %v360
    %860 = vmatprep.subr.bf16.mxu0 %v363
    %861 = vmatpush1.bf16.msra.mxu0 %v362
    %862 = vmatprep.subr.bf16.mxu0 0
    %863 = vmatpush1.bf16.msra.mxu0 0
    %864 = vmatprep.subr.bf16.mxu0 0
    %865 = vmatpush1.bf16.msra.mxu0 0
    %866 = vmatprep.subr.bf16.mxu0 0
    %867 = vmatpush1.bf16.msra.mxu0 0
    %868 = vmatprep.subr.bf16.mxu0 0
    %869 = vmatpush1.bf16.msra.mxu0 0
    %870 = vmatprep.subr.bf16.mxu0 0
    %871 = vmatpush1.bf16.msra.mxu0 0
    %872 = vmatprep.subr.bf16.mxu0 0
    %873 = vmatpush1.bf16.msra.mxu0 0
    %874 = vmatprep.subr.bf16.mxu0 0
    %875 = vmatpush1.bf16.msra.mxu0 0
    %876 = vmatprep.subr.bf16.mxu0 0
    %877 = vmatpush1.bf16.msra.mxu0 0
    %878 = vmatprep.mubr.bf16.mxu0 0
    %879 = vmatmul.mubr.bf16.gmra.mrb[0].mxu0 %v845
    %v880 = vpop.f32.mrb[0].mxu0
    %v881 = vadd.f32 0.0, %v880
    %v882 = vpop.f32.mrb[0].mxu0
    %v883 = vadd.f32 0.0, %v882
    %v884 = vpop.f32.mrb[0].mxu0
    %v885 = vpop.f32.mrb[0].mxu0
    %886 = vdwg.mxu0
    %v887 = vadd.f32 %v843, %v881
    %v888 = vsub.f32 0.0, %v887
    %v889 = vmul.f32 %v888, 1.442695
    %v890 = vpow.pop %v889
    %v891 = vadd.f32 %v890, 1.0
    %v892 = vrcp.pop %v891
    %v893 = vadd.f32 %v883, %v432
    %v894 = vmul.f32 %v892, %v893
    %v895 = vadd.f32 %v844, %v894
    %v896 = vtanh.pop %v895
    %897 = vset.pattern.permute.xlu0 7
    %898 = vperm.xlu0 %897, %v438
    %v899 = vpop.permute.xlu0 %898
    %v901 = vmul.f32 %v899, %v896
    %902 = vset.pattern.permute.xlu0 7
    %903 = vperm.xlu0 %902, %v445
    %v904 = vpop.permute.xlu0 %903
    %v906 = vmul.f32 %v904, %v842
    %v907 = vadd.f32 %v901, %v906
    %908 = vst [vmem:[#allocation8] sm:$0xff] %v907
    // Predicated region
    $region34: #{attention_gru.1} parent=1 // pred_check
      _
    $region35: #{attention_gru.1} parent=1 // pred_check_branch
      %910 = sbr.rel (0) target = $region37
    $region36: #{attention_gru.1} parent=1 // pred_region
      %s912 = ssub.s32 128, 128
      %913 = vsyncadd [#allocation5], %s912
      %s915 = sshll.u32 [#allocation8], 4
      %s916 = int_to_ptr.vmem [resolvable:$true] %s915
      %918 = dma.vmem_to_hbm [thread:$0]  %s916, 128, %s6, [#allocation5]
    $region37: #{attention_gru.1} parent=1 // pred_fallthru
      _
    // Predicated region
    $region38: #{attention_gru.1} parent=1 // pred_check
      _
    $region39: #{attention_gru.1} parent=1 // pred_check_branch
      %920 = sbr.rel (0) target = $region41
    $region40: #{attention_gru.1} parent=1 // pred_region
      %921 = dma.done [#allocation5], 128
    $region41: #{attention_gru.1} parent=1 // pred_fallthru
      _
    %922 = vsyncpa [#allocation4], 1
    %923 = vsyncpa [#allocation7], 1
    %924 = vsyncpa [#allocation5], 1

</llo_original>
